<compile_context>
chip_gen: v5e
topology: v5e:2x2
jax: 0.10.0
libtpu: 0.0.40
codegen_flags: <defaults>
</compile_context>

<pallas_src>
import functools

import jax
import jax.numpy as jnp
from jax import lax
from jax.experimental import pallas as pl
from jax.experimental.pallas import tpu as pltpu

_EPS = 1e-5


def _make_kernel(num_hidden_layers, use_dropout, use_bf16, training):
    """Builds the fused forward kernel.

    Kernel ref order:
      (x, bn0_gamma, bn0_beta,
       [W_i, b_i, gamma_i, beta_i, (mask_i)] * num_hidden_layers,
       W_out_padded, b_out_padded, out)
    """

    def matmul(h, w_ref):
        w = w_ref[...]
        if use_bf16:
            h = h.astype(jnp.bfloat16)
        return jnp.dot(h, w, preferred_element_type=jnp.float32)

    def batchnorm(h, gamma, beta):
        if training:
            mean = jnp.mean(h, axis=0, keepdims=True)
            c = h - mean                       # centered once, reused for var & norm
            # PyTorch normalizes the forward pass with the *biased* variance.
            var = jnp.mean(c * c, axis=0, keepdims=True)
        else:
            # Fresh (untrained) running stats: mean = 0, var = 1.
            c = h
            var = jnp.ones((1, h.shape[1]), jnp.float32)
        return c * lax.rsqrt(var + jnp.float32(_EPS)) * gamma + beta

    def kernel(*refs):
        x_ref = refs[0]
        o_ref = refs[-1]
        params = refs[1:-1]

        idx = 0
        g0 = params[idx][...]
        b0 = params[idx + 1][...]
        idx += 2
        h = batchnorm(x_ref[...].astype(jnp.float32), g0, b0)

        for _ in range(num_hidden_layers):
            w_ref = params[idx]
            b = params[idx + 1][...]
            g = params[idx + 2][...]
            be = params[idx + 3][...]
            idx += 4
            h = matmul(h, w_ref) + b
            h = jnp.maximum(h, jnp.float32(0.0))          # ReLU
            h = batchnorm(h, g, be)
            if use_dropout:
                h = h * params[idx][...]                  # pre-scaled {0, 1/(1-p)}
                idx += 1

        w_out_ref = params[idx]
        b_out = params[idx + 1][...]
        # Lane-dense (128-multiple) output store.
        o_ref[...] = matmul(h, w_out_ref) + b_out

    return kernel


def model_nn_forward(x, params, *, p=0.4, training=True, dropout_key=None,
                     use_bf16_matmul=True):
    """Runs the fused ModelNN forward pass as one Pallas kernel call."""
    batch, nfeat = x.shape
    out_size = int(params["b_out"].shape[-1])
    out_pad = max(128, ((out_size + 127) // 128) * 128)   # lane-dense output slab

    use_dropout = bool(training) and (p > 0.0)
    wdtype = jnp.bfloat16 if use_bf16_matmul else jnp.float32

    # --- flatten parameters (weights pre-cast for the MXU) --------------------
    flat = [params["bn0_gamma"], params["bn0_beta"]]

    mask_keys = None
    if use_dropout:
        if dropout_key is None:
            dropout_key = jax.random.PRNGKey(0)
        # Guard p >= 1: everything dropped, scale 0 (matches torch's all-zero output).
        scale = 0.0 if p >= 1.0 else 1.0 / (1.0 - p)
        mask_keys = jax.random.split(dropout_key, len(params["hidden"]))

    for i, (w, b, g, be) in enumerate(params["hidden"]):
        flat += [w.astype(wdtype), b, g, be]
        if use_dropout:
            keep = jax.random.bernoulli(mask_keys[i], 1.0 - p, (batch, w.shape[1]))
            flat.append(keep.astype(jnp.float32) * jnp.float32(scale))

    w_out = params["w_out"]
    in_size = w_out.shape[0]
    w_out_p = jnp.zeros((in_size, out_pad), jnp.float32).at[:, :out_size].set(w_out)
    b_out_p = jnp.zeros((1, out_pad), jnp.float32).at[:, :out_size].set(params["b_out"])
    flat += [w_out_p.astype(wdtype), b_out_p]

    # --- cost estimate & VMEM budget ------------------------------------------
    flops = 0
    cur = nfeat
    for (w, _, _, _) in params["hidden"]:
        flops += 2 * batch * cur * int(w.shape[1])
        cur = int(w.shape[1])
    flops += 2 * batch * cur * out_pad
    transcendentals = nfeat + sum(int(w.shape[1]) for (w, _, _, _) in params["hidden"])

    bytes_accessed = int(x.size) * x.dtype.itemsize
    bytes_accessed += sum(int(a.size) * a.dtype.itemsize for a in flat)
    bytes_accessed += batch * out_pad * 4

    vmem_limit = int(min(max(2 * bytes_accessed + (2 << 20), 16 << 20), 64 << 20))

    kernel = _make_kernel(len(params["hidden"]), use_dropout, use_bf16_matmul, training)

    out = pl.pallas_call(
        kernel,
        out_shape=jax.ShapeDtypeStruct((batch, out_pad), jnp.float32),
        in_specs=[pl.BlockSpec(memory_space=pltpu.MemorySpace.VMEM)] * (1 + len(flat)),
        out_specs=pl.BlockSpec(memory_space=pltpu.MemorySpace.VMEM),
        compiler_params=pltpu.CompilerParams(vmem_limit_bytes=vmem_limit),
        cost_estimate=pl.CostEstimate(
            flops=int(flops),
            transcendentals=int(transcendentals),
            bytes_accessed=int(bytes_accessed),
        ),
    )(x, *flat)

    return out[:, :out_size]


def init_params(key, num_numerical_cols, output_size, layers):
    """Deterministic parameter init (PyTorch-style uniform bounds for Linear)."""
    params = {
        "bn0_gamma": jnp.ones((1, num_numerical_cols), jnp.float32),
        "bn0_beta": jnp.zeros((1, num_numerical_cols), jnp.float32),
        "hidden": [],
    }
    in_size = num_numerical_cols
    for hid in layers:
        key, kw, kb = jax.random.split(key, 3)
        bound = float(1.0 / (in_size ** 0.5))
        w = jax.random.uniform(kw, (in_size, hid), jnp.float32, -bound, bound)
        b = jax.random.uniform(kb, (1, hid), jnp.float32, -bound, bound)
        params["hidden"].append(
            (w, b, jnp.ones((1, hid), jnp.float32), jnp.zeros((1, hid), jnp.float32))
        )
        in_size = hid
    key, kw, kb = jax.random.split(key, 3)
    bound = float(1.0 / (in_size ** 0.5))
    params["w_out"] = jax.random.uniform(kw, (in_size, output_size), jnp.float32, -bound, bound)
    params["b_out"] = jax.random.uniform(kb, (1, output_size), jnp.float32, -bound, bound)
    return params


def reference_forward(x, params, *, use_bf16_matmul=False):
    """Pure-JAX reference (training-mode BN, dropout disabled)."""
    def bn(h, g, b):
        mean = h.mean(0, keepdims=True)
        c = h - mean
        var = (c * c).mean(0, keepdims=True)
        return c * lax.rsqrt(var + _EPS) * g + b

    def mm(h, w):
        if use_bf16_matmul:
            return jnp.dot(h.astype(jnp.bfloat16), w.astype(jnp.bfloat16),
                           preferred_element_type=jnp.float32)
        return jnp.dot(h, w, preferred_element_type=jnp.float32)

    h = bn(x, params["bn0_gamma"], params["bn0_beta"])
    for (w, b, g, be) in params["hidden"]:
        h = jnp.maximum(mm(h, w) + b, 0.0)
        h = bn(h, g, be)
    return mm(h, params["w_out"]) + params["b_out"]


if __name__ == "__main__":
    # ModelNN(num_numerical_cols=32, output_size=4, layers=[64, 32], p=0.4)
    batch = 8
    num_numerical_cols = 32
    output_size = 4
    layers = [64, 32]

    key = jax.random.PRNGKey(0)
    key, kx, kp, kd = jax.random.split(key, 4)
    x = jax.random.normal(kx, (batch, num_numerical_cols), jnp.float32)
    params = init_params(kp, num_numerical_cols, output_size, layers)

    # 1) Exact-precision check: f32 matmuls, dropout off, vs pure-JAX reference.
    out_f32 = model_nn_forward(x, params, p=0.0, training=True, use_bf16_matmul=False)
    jax.block_until_ready(out_f32)
    ref = reference_forward(x, params, use_bf16_matmul=False)
    assert out_f32.shape == (batch, output_size)
    assert jnp.allclose(out_f32, ref, atol=1e-4, rtol=1e-4), "f32 mismatch vs reference"

    # 2) Default bf16-MXU path, dropout off (looser tolerance for bf16 rounding).
    out_bf16 = model_nn_forward(x, params, p=0.0, training=True, use_bf16_matmul=True)
    jax.block_until_ready(out_bf16)
    assert jnp.allclose(out_bf16, ref, atol=5e-2, rtol=5e-2), "bf16 mismatch vs reference"

    # 3) Full forward with dropout p=0.4 (training mode), as in the PyTorch module.
    #    RNG stream differs from torch.nn.Dropout (same semantics, different bits).
    out = model_nn_forward(x, params, p=0.4, training=True, dropout_key=kd)
    jax.block_until_ready(out)
    assert out.shape == (batch, output_size)
    assert bool(jnp.all(jnp.isfinite(out)))

    print("KERNEL_OK")
</pallas_src>

<mosaic_0001>
module attributes {stable_mosaic.version = 11 : i64} {
  func.func @kernel(%arg0: memref<8x32xf32, #tpu.memory_space<vmem>>, %arg1: memref<1x32xf32, #tpu.memory_space<vmem>>, %arg2: memref<1x32xf32, #tpu.memory_space<vmem>>, %arg3: memref<32x64xf32, #tpu.memory_space<vmem>>, %arg4: memref<1x64xf32, #tpu.memory_space<vmem>>, %arg5: memref<1x64xf32, #tpu.memory_space<vmem>>, %arg6: memref<1x64xf32, #tpu.memory_space<vmem>>, %arg7: memref<64x32xf32, #tpu.memory_space<vmem>>, %arg8: memref<1x32xf32, #tpu.memory_space<vmem>>, %arg9: memref<1x32xf32, #tpu.memory_space<vmem>>, %arg10: memref<1x32xf32, #tpu.memory_space<vmem>>, %arg11: memref<32x128xf32, #tpu.memory_space<vmem>>, %arg12: memref<1x128xf32, #tpu.memory_space<vmem>>, %arg13: memref<8x128xf32, #tpu.memory_space<vmem>>) attributes {dimension_semantics = [], scalar_prefetch = 0 : i64, scratch_operands = 0 : i64, tpu.core_type = #tpu.core_type<tc>} {
    %c0 = arith.constant 0 : index
    %c0_0 = arith.constant 0 : index
    %0 = vector.load %arg1[%c0, %c0_0] : memref<1x32xf32, #tpu.memory_space<vmem>>, vector<1x32xf32>
    %c0_1 = arith.constant 0 : index
    %c0_2 = arith.constant 0 : index
    %1 = vector.load %arg2[%c0_1, %c0_2] : memref<1x32xf32, #tpu.memory_space<vmem>>, vector<1x32xf32>
    %c0_3 = arith.constant 0 : index
    %c0_4 = arith.constant 0 : index
    %2 = vector.load %arg0[%c0_3, %c0_4] : memref<8x32xf32, #tpu.memory_space<vmem>>, vector<8x32xf32>
    %cst = arith.constant dense<0.000000e+00> : vector<32xf32>
    %3 = vector.multi_reduction <add>, %2, %cst [0] : vector<8x32xf32> to vector<32xf32>
    %4 = vector.shape_cast %3 : vector<32xf32> to vector<1x32xf32>
    %cst_5 = arith.constant 8.000000e+00 : f32
    %5 = vector.broadcast %cst_5 : f32 to vector<1x32xf32>
    %6 = arith.divf %4, %5 : vector<1x32xf32>
    %7 = vector.broadcast %6 : vector<1x32xf32> to vector<8x32xf32>
    %8 = arith.subf %2, %7 : vector<8x32xf32>
    %9 = arith.mulf %8, %8 : vector<8x32xf32>
    %cst_6 = arith.constant dense<0.000000e+00> : vector<32xf32>
    %10 = vector.multi_reduction <add>, %9, %cst_6 [0] : vector<8x32xf32> to vector<32xf32>
    %11 = vector.shape_cast %10 : vector<32xf32> to vector<1x32xf32>
    %cst_7 = arith.constant 8.000000e+00 : f32
    %12 = vector.broadcast %cst_7 : f32 to vector<1x32xf32>
    %13 = arith.divf %11, %12 : vector<1x32xf32>
    %cst_8 = arith.constant 9.99999974E-6 : f32
    %14 = vector.broadcast %cst_8 : f32 to vector<1x32xf32>
    %15 = arith.addf %13, %14 : vector<1x32xf32>
    %16 = math.rsqrt %15 : vector<1x32xf32>
    %17 = vector.broadcast %16 : vector<1x32xf32> to vector<8x32xf32>
    %18 = arith.mulf %8, %17 : vector<8x32xf32>
    %19 = vector.broadcast %0 : vector<1x32xf32> to vector<8x32xf32>
    %20 = arith.mulf %18, %19 : vector<8x32xf32>
    %21 = vector.broadcast %1 : vector<1x32xf32> to vector<8x32xf32>
    %22 = arith.addf %20, %21 : vector<8x32xf32>
    %c0_9 = arith.constant 0 : index
    %c0_10 = arith.constant 0 : index
    %23 = vector.load %arg4[%c0_9, %c0_10] : memref<1x64xf32, #tpu.memory_space<vmem>>, vector<1x64xf32>
    %c0_11 = arith.constant 0 : index
    %c0_12 = arith.constant 0 : index
    %24 = vector.load %arg5[%c0_11, %c0_12] : memref<1x64xf32, #tpu.memory_space<vmem>>, vector<1x64xf32>
    %c0_13 = arith.constant 0 : index
    %c0_14 = arith.constant 0 : index
    %25 = vector.load %arg6[%c0_13, %c0_14] : memref<1x64xf32, #tpu.memory_space<vmem>>, vector<1x64xf32>
    %c0_15 = arith.constant 0 : index
    %c0_16 = arith.constant 0 : index
    %26 = vector.load %arg3[%c0_15, %c0_16] : memref<32x64xf32, #tpu.memory_space<vmem>>, vector<32x64xf32>
    %cst_17 = arith.constant dense<0.000000e+00> : vector<8x64xf32>
    %27 = tpu.matmul %22, %26, %cst_17 {dimension_numbers = #tpu.dot_dimension_numbers<[1], [0], [0], [1], [0, 0, 1, 1], [], []>} : vector<8x32xf32>, vector<32x64xf32>, vector<8x64xf32> -> vector<8x64xf32>
    %28 = vector.broadcast %23 : vector<1x64xf32> to vector<8x64xf32>
    %29 = arith.addf %27, %28 : vector<8x64xf32>
    %cst_18 = arith.constant 0.000000e+00 : f32
    %30 = vector.broadcast %cst_18 : f32 to vector<8x64xf32>
    %31 = arith.maximumf %29, %30 : vector<8x64xf32>
    %cst_19 = arith.constant dense<0.000000e+00> : vector<64xf32>
    %32 = vector.multi_reduction <add>, %31, %cst_19 [0] : vector<8x64xf32> to vector<64xf32>
    %33 = vector.shape_cast %32 : vector<64xf32> to vector<1x64xf32>
    %cst_20 = arith.constant 8.000000e+00 : f32
    %34 = vector.broadcast %cst_20 : f32 to vector<1x64xf32>
    %35 = arith.divf %33, %34 : vector<1x64xf32>
    %36 = vector.broadcast %35 : vector<1x64xf32> to vector<8x64xf32>
    %37 = arith.subf %31, %36 : vector<8x64xf32>
    %38 = arith.mulf %37, %37 : vector<8x64xf32>
    %cst_21 = arith.constant dense<0.000000e+00> : vector<64xf32>
    %39 = vector.multi_reduction <add>, %38, %cst_21 [0] : vector<8x64xf32> to vector<64xf32>
    %40 = vector.shape_cast %39 : vector<64xf32> to vector<1x64xf32>
    %cst_22 = arith.constant 8.000000e+00 : f32
    %41 = vector.broadcast %cst_22 : f32 to vector<1x64xf32>
    %42 = arith.divf %40, %41 : vector<1x64xf32>
    %cst_23 = arith.constant 9.99999974E-6 : f32
    %43 = vector.broadcast %cst_23 : f32 to vector<1x64xf32>
    %44 = arith.addf %42, %43 : vector<1x64xf32>
    %45 = math.rsqrt %44 : vector<1x64xf32>
    %46 = vector.broadcast %45 : vector<1x64xf32> to vector<8x64xf32>
    %47 = arith.mulf %37, %46 : vector<8x64xf32>
    %48 = vector.broadcast %24 : vector<1x64xf32> to vector<8x64xf32>
    %49 = arith.mulf %47, %48 : vector<8x64xf32>
    %50 = vector.broadcast %25 : vector<1x64xf32> to vector<8x64xf32>
    %51 = arith.addf %49, %50 : vector<8x64xf32>
    %c0_24 = arith.constant 0 : index
    %c0_25 = arith.constant 0 : index
    %52 = vector.load %arg8[%c0_24, %c0_25] : memref<1x32xf32, #tpu.memory_space<vmem>>, vector<1x32xf32>
    %c0_26 = arith.constant 0 : index
    %c0_27 = arith.constant 0 : index
    %53 = vector.load %arg9[%c0_26, %c0_27] : memref<1x32xf32, #tpu.memory_space<vmem>>, vector<1x32xf32>
    %c0_28 = arith.constant 0 : index
    %c0_29 = arith.constant 0 : index
    %54 = vector.load %arg10[%c0_28, %c0_29] : memref<1x32xf32, #tpu.memory_space<vmem>>, vector<1x32xf32>
    %c0_30 = arith.constant 0 : index
    %c0_31 = arith.constant 0 : index
    %55 = vector.load %arg7[%c0_30, %c0_31] : memref<64x32xf32, #tpu.memory_space<vmem>>, vector<64x32xf32>
    %cst_32 = arith.constant dense<0.000000e+00> : vector<8x32xf32>
    %56 = tpu.matmul %51, %55, %cst_32 {dimension_numbers = #tpu.dot_dimension_numbers<[1], [0], [0], [1], [0, 0, 1, 1], [], []>} : vector<8x64xf32>, vector<64x32xf32>, vector<8x32xf32> -> vector<8x32xf32>
    %57 = vector.broadcast %52 : vector<1x32xf32> to vector<8x32xf32>
    %58 = arith.addf %56, %57 : vector<8x32xf32>
    %cst_33 = arith.constant 0.000000e+00 : f32
    %59 = vector.broadcast %cst_33 : f32 to vector<8x32xf32>
    %60 = arith.maximumf %58, %59 : vector<8x32xf32>
    %cst_34 = arith.constant dense<0.000000e+00> : vector<32xf32>
    %61 = vector.multi_reduction <add>, %60, %cst_34 [0] : vector<8x32xf32> to vector<32xf32>
    %62 = vector.shape_cast %61 : vector<32xf32> to vector<1x32xf32>
    %cst_35 = arith.constant 8.000000e+00 : f32
    %63 = vector.broadcast %cst_35 : f32 to vector<1x32xf32>
    %64 = arith.divf %62, %63 : vector<1x32xf32>
    %65 = vector.broadcast %64 : vector<1x32xf32> to vector<8x32xf32>
    %66 = arith.subf %60, %65 : vector<8x32xf32>
    %67 = arith.mulf %66, %66 : vector<8x32xf32>
    %cst_36 = arith.constant dense<0.000000e+00> : vector<32xf32>
    %68 = vector.multi_reduction <add>, %67, %cst_36 [0] : vector<8x32xf32> to vector<32xf32>
    %69 = vector.shape_cast %68 : vector<32xf32> to vector<1x32xf32>
    %cst_37 = arith.constant 8.000000e+00 : f32
    %70 = vector.broadcast %cst_37 : f32 to vector<1x32xf32>
    %71 = arith.divf %69, %70 : vector<1x32xf32>
    %cst_38 = arith.constant 9.99999974E-6 : f32
    %72 = vector.broadcast %cst_38 : f32 to vector<1x32xf32>
    %73 = arith.addf %71, %72 : vector<1x32xf32>
    %74 = math.rsqrt %73 : vector<1x32xf32>
    %75 = vector.broadcast %74 : vector<1x32xf32> to vector<8x32xf32>
    %76 = arith.mulf %66, %75 : vector<8x32xf32>
    %77 = vector.broadcast %53 : vector<1x32xf32> to vector<8x32xf32>
    %78 = arith.mulf %76, %77 : vector<8x32xf32>
    %79 = vector.broadcast %54 : vector<1x32xf32> to vector<8x32xf32>
    %80 = arith.addf %78, %79 : vector<8x32xf32>
    %c0_39 = arith.constant 0 : index
    %c0_40 = arith.constant 0 : index
    %81 = vector.load %arg12[%c0_39, %c0_40] : memref<1x128xf32, #tpu.memory_space<vmem>>, vector<1x128xf32>
    %c0_41 = arith.constant 0 : index
    %c0_42 = arith.constant 0 : index
    %82 = vector.load %arg11[%c0_41, %c0_42] : memref<32x128xf32, #tpu.memory_space<vmem>>, vector<32x128xf32>
    %cst_43 = arith.constant dense<0.000000e+00> : vector<8x128xf32>
    %83 = tpu.matmul %80, %82, %cst_43 {dimension_numbers = #tpu.dot_dimension_numbers<[1], [0], [0], [1], [0, 0, 1, 1], [], []>} : vector<8x32xf32>, vector<32x128xf32>, vector<8x128xf32> -> vector<8x128xf32>
    %84 = vector.broadcast %81 : vector<1x128xf32> to vector<8x128xf32>
    %85 = arith.addf %83, %84 : vector<8x128xf32>
    %c0_44 = arith.constant 0 : index
    %c0_45 = arith.constant 0 : index
    %86 = vector.load %arg13[%c0_44, %c0_45] : memref<8x128xf32, #tpu.memory_space<vmem>>, vector<8x128xf32>
    tpu.vector_store %arg13[%c0_44, %c0_45], %85 {strides = array<i32>} : memref<8x128xf32, #tpu.memory_space<vmem>>, vector<8x128xf32>,
    return
  }
}

</mosaic_0001>

<llo_original>
// kernel: tpu_custom_call.1
$region0: #{tpu_custom_call.1}
  #allocation0 [shape = 'u32[]', space=smem, size = 0x4, offset = 0x4, fixed_abs, tag = 'smem constant byte address 0x4 - core index']
  #allocation1 [shape = 'u32[72,128]{1,0:T(1,128)}', space=vmem, size = 0x9000, scoped, tag = 'internal scratch']
  %s0 = inlined_call_operand.vmem [shape: f32[8,32], index: 0, kind: input, shape index: {}]
  %s1 = inlined_call_operand.vmem [shape: f32[1,32], index: 1, kind: input, shape index: {}]
  %s2 = inlined_call_operand.vmem [shape: f32[1,32], index: 2, kind: input, shape index: {}]
  %s3 = inlined_call_operand.vmem [shape: f32[32,64], index: 3, kind: input, shape index: {}]
  %s4 = inlined_call_operand.vmem [shape: f32[1,64], index: 4, kind: input, shape index: {}]
  %s5 = inlined_call_operand.vmem [shape: f32[1,64], index: 5, kind: input, shape index: {}]
  %s6 = inlined_call_operand.vmem [shape: f32[1,64], index: 6, kind: input, shape index: {}]
  %s7 = inlined_call_operand.vmem [shape: f32[64,32], index: 7, kind: input, shape index: {}]
  %s8 = inlined_call_operand.vmem [shape: f32[1,32], index: 8, kind: input, shape index: {}]
  %s9 = inlined_call_operand.vmem [shape: f32[1,32], index: 9, kind: input, shape index: {}]
  %s10 = inlined_call_operand.vmem [shape: f32[1,32], index: 10, kind: input, shape index: {}]
  %s11 = inlined_call_operand.vmem [shape: f32[32,128], index: 11, kind: input, shape index: {}]
  %s12 = inlined_call_operand.vmem [shape: f32[1,128], index: 12, kind: input, shape index: {}]
  %s13 = inlined_call_operand.hbm [shape: f32[8,128], index: 13, kind: output, shape index: {}]
  %s14 = sld [smem:[#allocation0]]
  $region62: #{tpu_custom_call.1} parent=0
    _
  %s16 = ssub.s32 1, %s14
  %s17 = scalar_select 0, %s16, %s14
  $region1: #{tpu_custom_call.1} parent=0
    #allocation2 [shape = 'u8[4096]{0}', space=vmem, size = 0x1000, scoped, tag = 'output window, operand 0, single buffered']
    #allocation3 [shape = 's32[1]{0}', space=sflag, size = 0x4, scoped, tag = 'scoped memory for tpu_custom_call.1']
    %18 = vsyncpa [#allocation3], 0
    // Predicated region
    $region2: #{tpu_custom_call.1} parent=1 // pred_check
      _
    $region3: #{tpu_custom_call.1} parent=1 // pred_check_branch
      %20 = sbr.rel (0) target = $region5
    $region4: #{tpu_custom_call.1} parent=1 // pred_region
      _
    $region5: #{tpu_custom_call.1} parent=1 // pred_fallthru
      _
    // Predicated region
    $region6: #{tpu_custom_call.1} parent=1 // pred_check
      _
    $region7: #{tpu_custom_call.1} parent=1 // pred_check_branch
      %22 = sbr.rel (0) target = $region9
    $region8: #{tpu_custom_call.1} parent=1 // pred_region
      _
    $region9: #{tpu_custom_call.1} parent=1 // pred_fallthru
      _
    // Predicated region
    $region10: #{tpu_custom_call.1} parent=1 // pred_check
      _
    $region11: #{tpu_custom_call.1} parent=1 // pred_check_branch
      %24 = sbr.rel (0) target = $region13
    $region12: #{tpu_custom_call.1} parent=1 // pred_region
      _
    $region13: #{tpu_custom_call.1} parent=1 // pred_fallthru
      _
    // Predicated region
    $region14: #{tpu_custom_call.1} parent=1 // pred_check
      _
    $region15: #{tpu_custom_call.1} parent=1 // pred_check_branch
      %26 = sbr.rel (0) target = $region17
    $region16: #{tpu_custom_call.1} parent=1 // pred_region
      _
    $region17: #{tpu_custom_call.1} parent=1 // pred_fallthru
      _
    // Predicated region
    $region18: #{tpu_custom_call.1} parent=1 // pred_check
      _
    $region19: #{tpu_custom_call.1} parent=1 // pred_check_branch
      %28 = sbr.rel (0) target = $region21
    $region20: #{tpu_custom_call.1} parent=1 // pred_region
      _
    $region21: #{tpu_custom_call.1} parent=1 // pred_fallthru
      _
    // Predicated region
    $region22: #{tpu_custom_call.1} parent=1 // pred_check
      _
    $region23: #{tpu_custom_call.1} parent=1 // pred_check_branch
      %30 = sbr.rel (0) target = $region25
    $region24: #{tpu_custom_call.1} parent=1 // pred_region
      _
    $region25: #{tpu_custom_call.1} parent=1 // pred_fallthru
      _
    // Predicated region
    $region26: #{tpu_custom_call.1} parent=1 // pred_check
      _
    $region27: #{tpu_custom_call.1} parent=1 // pred_check_branch
      %32 = sbr.rel (0) target = $region29
    $region28: #{tpu_custom_call.1} parent=1 // pred_region
      _
    $region29: #{tpu_custom_call.1} parent=1 // pred_fallthru
      _
    // Predicated region
    $region30: #{tpu_custom_call.1} parent=1 // pred_check
      _
    $region31: #{tpu_custom_call.1} parent=1 // pred_check_branch
      %34 = sbr.rel (0) target = $region33
    $region32: #{tpu_custom_call.1} parent=1 // pred_region
      _
    $region33: #{tpu_custom_call.1} parent=1 // pred_fallthru
      _
    // Predicated region
    $region34: #{tpu_custom_call.1} parent=1 // pred_check
      _
    $region35: #{tpu_custom_call.1} parent=1 // pred_check_branch
      %36 = sbr.rel (0) target = $region37
    $region36: #{tpu_custom_call.1} parent=1 // pred_region
      _
    $region37: #{tpu_custom_call.1} parent=1 // pred_fallthru
      _
    // Predicated region
    $region38: #{tpu_custom_call.1} parent=1 // pred_check
      _
    $region39: #{tpu_custom_call.1} parent=1 // pred_check_branch
      %38 = sbr.rel (0) target = $region41
    $region40: #{tpu_custom_call.1} parent=1 // pred_region
      _
    $region41: #{tpu_custom_call.1} parent=1 // pred_fallthru
      _
    // Predicated region
    $region42: #{tpu_custom_call.1} parent=1 // pred_check
      _
    $region43: #{tpu_custom_call.1} parent=1 // pred_check_branch
      %40 = sbr.rel (0) target = $region45
    $region44: #{tpu_custom_call.1} parent=1 // pred_region
      _
    $region45: #{tpu_custom_call.1} parent=1 // pred_fallthru
      _
    // Predicated region
    $region46: #{tpu_custom_call.1} parent=1 // pred_check
      _
    $region47: #{tpu_custom_call.1} parent=1 // pred_check_branch
      %42 = sbr.rel (0) target = $region49
    $region48: #{tpu_custom_call.1} parent=1 // pred_region
      _
    $region49: #{tpu_custom_call.1} parent=1 // pred_fallthru
      _
    // Predicated region
    $region50: #{tpu_custom_call.1} parent=1 // pred_check
      _
    $region51: #{tpu_custom_call.1} parent=1 // pred_check_branch
      %44 = sbr.rel (0) target = $region53
    $region52: #{tpu_custom_call.1} parent=1 // pred_region
      _
    $region53: #{tpu_custom_call.1} parent=1 // pred_fallthru
      _
    %v45 = vld [vmem:[%s1] sm:$0x1]
    %v46 = vld [vmem:[%s2] sm:$0x1]
    %v47 = vld [vmem:[%s0] sm:$0xff]
    %vm48 = vcmask 261120
    %v49 = vsel %vm48, %v47, 0.0
    %v50 = vrot.slane %v49, 4
    %v51 = vadd.f32 %v49, %v50
    %v52 = vrot.slane %v51, 2
    %v53 = vadd.f32 %v51, %v52
    %v54 = vrot.slane %v53, 1
    %v55 = vadd.f32 %v53, %v54
    %v56 = vrcp.pop 8.0
    %v57 = vmul.f32 8.0, %v56
    %v58 = vsub.f32 1.0, %v57
    %v59 = vmul.f32 %v56, %v58
    %v60 = vadd.f32 %v56, %v59
    %vm61 = vweird.f32 %v56
    %v62 = vsel %vm61, %v56, %v60
    %v63 = vmul.f32 %v55, %v62
    %v64 = vsub.f32 %v47, %v63
    %v65 = vmul.f32 %v64, %v64
    %v66 = vsel %vm48, %v65, 0.0
    %v67 = vrot.slane %v66, 4
    %v68 = vadd.f32 %v66, %v67
    %v69 = vrot.slane %v68, 2
    %v70 = vadd.f32 %v68, %v69
    %v71 = vrot.slane %v70, 1
    %v72 = vadd.f32 %v70, %v71
    %v73 = vmul.f32 %v72, %v62
    %v74 = vadd.f32 %v73, 1e-05
    %v75 = vrsqrt.pop %v74
    %v76 = vmul.f32 %v75, %v74
    %v77 = vmul.f32 %v76, %v75
    %v78 = vmul.f32 0.5, %v77
    %v79 = vsub.f32 1.5, %v78
    %v80 = vmul.f32 %v75, %v79
    %vm81 = vweird.f32 %v74
    %vm82 = vweird.f32 %v75
    %vm83 = vmor %vm81, %vm82
    %v84 = vsel %vm83, %v75, %v80
    %v85 = vmul.f32 %v64, %v84
    %v87 = vperm.slane %v45, 0
    %v89 = vmul.f32 %v85, %v87
    %v91 = vperm.slane %v46, 0
    %v93 = vadd.f32 %v89, %v91
    %v94 = vld [vmem:[%s4] sm:$0x1]
    %v95 = vld [vmem:[%s5] sm:$0x1]
    %v96 = vld [vmem:[%s6] sm:$0x1]
    %v97 = vld [vmem:[%s3] sm:$0xff]
    %v98 = vld [vmem:[%s3 + $0x8] sm:$0xff]
    %v99 = vld [vmem:[%s3 + $0x10] sm:$0xff]
    %v100 = vld [vmem:[%s3 + $0x18] sm:$0xff]
    %v102 = vperm.slane %v94, 0
    %v105 = vsel %vm48, %v93, 0
    %107 = vmatpush.msra.mxu0 0.0
    %108 = vmatpush.msra.mxu0 0.0
    %109 = vmatpush.msra.mxu0 0.0
    %110 = vmatpush.msra.mxu0 0.0
    %111 = vmatpush.msra.mxu0 0.0
    %112 = vmatpush.msra.mxu0 0.0
    %113 = vmatpush.msra.mxu0 0.0
    %114 = vmatpush.msra.mxu0 0.0
    %115 = vmatpush.msra.mxu0 0.0
    %116 = vmatpush.msra.mxu0 0.0
    %117 = vmatpush.msra.mxu0 0.0
    %118 = vmatpush.msra.mxu0 0.0
    %119 = vmatpush.msra.mxu0 %v100
    %120 = vmatpush.msra.mxu0 %v99
    %121 = vmatpush.msra.mxu0 %v98
    %122 = vmatpush.msra.mxu0 %v97
    %123 = vmatmul.f32.gmra.mxu0 %v105
    %v124 = vpop.f32.mrf.mxu0
    %v125 = vadd.f32 %v102, %v124
    %126 = vdwg.mxu0
    %v127 = vmax.f32 %v125, 0.0
    %vm128 = vcmask 523264
    %v129 = vsel %vm128, %v127, 0.0
    %v130 = vrot.slane %v129, 4
    %v131 = vadd.f32 %v129, %v130
    %v132 = vrot.slane %v131, 2
    %v133 = vadd.f32 %v131, %v132
    %v134 = vrot.slane %v133, 1
    %v135 = vadd.f32 %v133, %v134
    %v136 = vmul.f32 %v135, %v62
    %v137 = vsub.f32 %v127, %v136
    %v138 = vmul.f32 %v137, %v137
    %v139 = vsel %vm128, %v138, 0.0
    %v140 = vrot.slane %v139, 4
    %v141 = vadd.f32 %v139, %v140
    %v142 = vrot.slane %v141, 2
    %v143 = vadd.f32 %v141, %v142
    %v144 = vrot.slane %v143, 1
    %v145 = vadd.f32 %v143, %v144
    %v146 = vmul.f32 %v145, %v62
    %v147 = vadd.f32 %v146, 1e-05
    %v148 = vrsqrt.pop %v147
    %v149 = vmul.f32 %v148, %v147
    %v150 = vmul.f32 %v149, %v148
    %v151 = vmul.f32 0.5, %v150
    %v152 = vsub.f32 1.5, %v151
    %v153 = vmul.f32 %v148, %v152
    %vm154 = vweird.f32 %v147
    %vm155 = vweird.f32 %v148
    %vm156 = vmor %vm154, %vm155
    %v157 = vsel %vm156, %v148, %v153
    %v158 = vmul.f32 %v137, %v157
    %v160 = vperm.slane %v95, 0
    %v162 = vmul.f32 %v158, %v160
    %v164 = vperm.slane %v96, 0
    %v166 = vadd.f32 %v162, %v164
    %v167 = vld [vmem:[%s8] sm:$0x1]
    %v168 = vld [vmem:[%s9] sm:$0x1]
    %v169 = vld [vmem:[%s10] sm:$0x1]
    %v170 = vld [vmem:[%s7] sm:$0xff]
    %v171 = vld [vmem:[%s7 + $0x8] sm:$0xff]
    %v172 = vld [vmem:[%s7 + $0x10] sm:$0xff]
    %v173 = vld [vmem:[%s7 + $0x18] sm:$0xff]
    %v174 = vld [vmem:[%s7 + $0x20] sm:$0xff]
    %v175 = vld [vmem:[%s7 + $0x28] sm:$0xff]
    %v176 = vld [vmem:[%s7 + $0x30] sm:$0xff]
    %v177 = vld [vmem:[%s7 + $0x38] sm:$0xff]
    %v179 = vperm.slane %v167, 0
    %v182 = vsel %vm128, %v166, 0
    %184 = vmatpush.msra.mxu0 0.0
    %185 = vmatpush.msra.mxu0 0.0
    %186 = vmatpush.msra.mxu0 0.0
    %187 = vmatpush.msra.mxu0 0.0
    %188 = vmatpush.msra.mxu0 0.0
    %189 = vmatpush.msra.mxu0 0.0
    %190 = vmatpush.msra.mxu0 0.0
    %191 = vmatpush.msra.mxu0 0.0
    %192 = vmatpush.msra.mxu0 %v177
    %193 = vmatpush.msra.mxu0 %v176
    %194 = vmatpush.msra.mxu0 %v175
    %195 = vmatpush.msra.mxu0 %v174
    %196 = vmatpush.msra.mxu0 %v173
    %197 = vmatpush.msra.mxu0 %v172
    %198 = vmatpush.msra.mxu0 %v171
    %199 = vmatpush.msra.mxu0 %v170
    %200 = vmatmul.f32.gmra.mxu0 %v182
    %v201 = vpop.f32.mrf.mxu0
    %v202 = vadd.f32 %v179, %v201
    %203 = vdwg.mxu0
    %v204 = vmax.f32 %v202, 0.0
    %v205 = vsel %vm48, %v204, 0.0
    %v206 = vrot.slane %v205, 4
    %v207 = vadd.f32 %v205, %v206
    %v208 = vrot.slane %v207, 2
    %v209 = vadd.f32 %v207, %v208
    %v210 = vrot.slane %v209, 1
    %v211 = vadd.f32 %v209, %v210
    %v212 = vmul.f32 %v211, %v62
    %v213 = vsub.f32 %v204, %v212
    %v214 = vmul.f32 %v213, %v213
    %v215 = vsel %vm48, %v214, 0.0
    %v216 = vrot.slane %v215, 4
    %v217 = vadd.f32 %v215, %v216
    %v218 = vrot.slane %v217, 2
    %v219 = vadd.f32 %v217, %v218
    %v220 = vrot.slane %v219, 1
    %v221 = vadd.f32 %v219, %v220
    %v222 = vmul.f32 %v221, %v62
    %v223 = vadd.f32 %v222, 1e-05
    %v224 = vrsqrt.pop %v223
    %v225 = vmul.f32 %v224, %v223
    %v226 = vmul.f32 %v225, %v224
    %v227 = vmul.f32 0.5, %v226
    %v228 = vsub.f32 1.5, %v227
    %v229 = vmul.f32 %v224, %v228
    %vm230 = vweird.f32 %v223
    %vm231 = vweird.f32 %v224
    %vm232 = vmor %vm230, %vm231
    %v233 = vsel %vm232, %v224, %v229
    %v234 = vmul.f32 %v213, %v233
    %v236 = vperm.slane %v168, 0
    %v238 = vmul.f32 %v234, %v236
    %v240 = vperm.slane %v169, 0
    %v242 = vadd.f32 %v238, %v240
    %v243 = vld [vmem:[%s12] sm:$0x1]
    %v244 = vld [vmem:[%s11] sm:$0xff]
    %v245 = vld [vmem:[%s11 + $0x8] sm:$0xff]
    %v246 = vld [vmem:[%s11 + $0x10] sm:$0xff]
    %v247 = vld [vmem:[%s11 + $0x18] sm:$0xff]
    %v249 = vperm.slane %v243, 0
    %v252 = vsel %vm48, %v242, 0
    %254 = vmatpush.msra.mxu0 0.0
    %255 = vmatpush.msra.mxu0 0.0
    %256 = vmatpush.msra.mxu0 0.0
    %257 = vmatpush.msra.mxu0 0.0
    %258 = vmatpush.msra.mxu0 0.0
    %259 = vmatpush.msra.mxu0 0.0
    %260 = vmatpush.msra.mxu0 0.0
    %261 = vmatpush.msra.mxu0 0.0
    %262 = vmatpush.msra.mxu0 0.0
    %263 = vmatpush.msra.mxu0 0.0
    %264 = vmatpush.msra.mxu0 0.0
    %265 = vmatpush.msra.mxu0 0.0
    %266 = vmatpush.msra.mxu0 %v247
    %267 = vmatpush.msra.mxu0 %v246
    %268 = vmatpush.msra.mxu0 %v245
    %269 = vmatpush.msra.mxu0 %v244
    %270 = vmatmul.f32.gmra.mxu0 %v252
    %v271 = vpop.f32.mrf.mxu0
    %v272 = vadd.f32 %v249, %v271
    %273 = vdwg.mxu0
    %274 = vst [vmem:[#allocation2] sm:$0xff] %v272
    // Predicated region
    $region54: #{tpu_custom_call.1} parent=1 // pred_check
      _
    $region55: #{tpu_custom_call.1} parent=1 // pred_check_branch
      %276 = sbr.rel (0) target = $region57
    $region56: #{tpu_custom_call.1} parent=1 // pred_region
      %278 = vsyncadd [#allocation3], 0
      %s280 = sshll.u32 [#allocation2], 4
      %s281 = int_to_ptr.vmem [resolvable:$true] %s280
      %s282 = sshll.u32 %s13, 4
      %s283 = int_to_ptr.hbm [resolvable:$true] %s282
      %285 = dma.vmem_to_hbm [thread:$0]  %s281, 128, %s283, [#allocation3]
    $region57: #{tpu_custom_call.1} parent=1 // pred_fallthru
      _
    // Predicated region
    $region58: #{tpu_custom_call.1} parent=1 // pred_check
      _
    $region59: #{tpu_custom_call.1} parent=1 // pred_check_branch
      %287 = sbr.rel (0) target = $region61
    $region60: #{tpu_custom_call.1} parent=1 // pred_region
      %289 = dma.done [#allocation3], 128
    $region61: #{tpu_custom_call.1} parent=1 // pred_fallthru
      _
    %290 = vsyncpa [#allocation3], 1

</llo_original>
